<compile_context>
chip_gen: v7x
topology: tpu7x:2x2x1
jax: 0.10.0
libtpu: 0.0.40
codegen_flags: <defaults>
</compile_context>

<pallas_src>
import functools

import jax
import jax.numpy as jnp
from jax import lax
from jax.experimental import pallas as pl
from jax.experimental.pallas import tpu as pltpu


def _round_up(n, m):
    return ((n + m - 1) // m) * m


def temporal_attention_kernel(x_ref, w_ref, o_ref, m_sc, l_sc, acc_sc,
                              *, t_total, t_block):
    """One (batch-block, time-block) step of online-softmax temporal attention.

    x_ref : (Bb, Tt, H)  VMEM block of x (f32 or bf16)
    w_ref : (1, 1, H)    lane-dense linear weight (f32)
    o_ref : (Bb, H)      context output block (written on the last time step)
    m_sc  : (Bb, 1)      running max          (f32 scratch)
    l_sc  : (Bb, 1)      running denominator  (f32 scratch)
    acc_sc: (Bb, H)      running context acc  (f32 scratch)
    """
    t_idx = pl.program_id(1)

    @pl.when(t_idx == 0)
    def _init():
        m_sc[...] = jnp.full_like(m_sc, -jnp.inf)
        l_sc[...] = jnp.zeros_like(l_sc)
        acc_sc[...] = jnp.zeros_like(acc_sc)

    xs = x_ref[...]                                   # native dtype (no f32 copy)
    w = w_ref[...].astype(jnp.float32)                # (1, 1, H)

    # fc(x) without the bias (a scalar bias cancels exactly in the softmax):
    # VPU multiply + XLU lane reduction, no degenerate MXU matmul.
    s = jnp.sum(xs.astype(jnp.float32) * w, axis=-1)  # (Bb, Tt) f32

    needs_mask = (t_total % t_block) != 0             # static (trace-time)
    if needs_mask:
        t_pos = t_idx * t_block + lax.broadcasted_iota(jnp.int32, s.shape, 1)
        valid = t_pos < t_total                       # (Bb, Tt)
        s = jnp.where(valid, s, -jnp.inf)             # padded steps -> -inf

    # Online softmax over the time axis (dim=1 of the original module).
    m_prev = m_sc[...]                                            # (Bb, 1)
    m_new = jnp.maximum(m_prev, jnp.max(s, axis=-1, keepdims=True))
    alpha = jnp.exp(m_prev - m_new)                               # (Bb, 1)
    p = jnp.exp(s - m_new)                                        # (Bb, Tt)
    l_sc[...] = alpha * l_sc[...] + jnp.sum(p, axis=-1, keepdims=True)

    x_f32 = xs.astype(jnp.float32)                    # cast per-use
    if needs_mask:
        # p is already 0 at padded steps; zero x too so garbage (NaN/Inf)
        # in the clipped block padding cannot poison the accumulator.
        x_f32 = jnp.where(valid[:, :, None], x_f32, 0.0)
    # context partial sum: VPU multiply + XLU sublane reduction over time.
    acc_sc[...] = alpha * acc_sc[...] + jnp.sum(x_f32 * p[:, :, None], axis=1)
    m_sc[...] = m_new

    @pl.when(t_idx == pl.num_programs(1) - 1)
    def _finalize():
        # Exact divide (finalize only, 1/T of the main traffic) -> no approx-
        # reciprocal error, kernel matches the reference to ~1e-6.
        o_ref[...] = (acc_sc[...] / l_sc[...]).astype(o_ref.dtype)


def _vmem_limits():
    """(scoped vmem limit to request, physical capacity) in bytes."""
    try:
        cap = int(pltpu.get_tpu_info().vmem_capacity_bytes)
    except Exception:
        cap = 64 * 1024 * 1024                      # v7x-safe fallback
    limit = int(min(cap * 3 // 4, 96 * 1024 * 1024))  # 48 MiB v7x, 96 MiB v5e/v6e
    return limit, cap


def _select_tiles(B, T, H, itemsize, work_budget, two_core_split):
    """Pick (Bb, Tt) from a padding-aware VMEM working-set budget."""
    sub = 8 * max(1, 4 // itemsize)                 # sublane quantum: 8 f32, 16 bf16
    h_pad = _round_up(H, 128)

    def per_row_bytes(tt):
        # Padded VMEM bytes per batch row per grid step:
        #   double-buffered x block + f32 product/broadcast temps +
        #   context accumulator / output row + lane-padded score rows.
        tt_x = _round_up(tt, sub)
        tt_f = _round_up(tt, 8)
        return (2 * tt_x * h_pad * itemsize
                + 2 * tt_f * h_pad * 4
                + 2 * h_pad * 4
                + 4 * _round_up(tt, 128) * 4)

    # Batch rows that must fit per step.  For B > 8 we keep batch blocks a
    # multiple of 8 so the (Bb, H) output block stays sublane-aligned.
    min_rows = B if B <= 8 else 8

    # Largest time tile (full T, or a multiple of `sub`) fitting min_rows rows.
    tt = T
    while tt > sub and per_row_bytes(tt) * min_rows > work_budget:
        tt = max(sub, _round_up(tt // 2, sub))
    Tt = min(T, tt)

    Bb = max(1, work_budget // per_row_bytes(Tt))
    if B <= 8:
        Bb = B                                      # single full-batch block
    else:
        if two_core_split and B >= 16:
            # v7x: keep >= 2 grid steps so both TensorCores get batch blocks.
            Bb = min(Bb, max(8, ((B // 2) // 8) * 8))
        if Bb >= B:
            Bb = B                                  # full batch (legal block)
        else:
            Bb = max(8, (Bb // 8) * 8)              # sublane-aligned batch block
    return int(Bb), int(Tt)


def temporal_attention(x, weight, bias=None):
    """x: (B, T, H) f32/bf16; weight: (1, H) nn.Linear layout; bias: (1,) or None.

    The scalar bias shifts every time step equally, so softmax(fc(x)) is
    mathematically identical with or without it; it is not sent to the kernel.
    """
    del bias
    B, T, H = x.shape
    w = weight.reshape(1, 1, H).astype(jnp.float32)   # lane-dense shared weight

    itemsize = jnp.dtype(x.dtype).itemsize
    vmem_limit, cap = _vmem_limits()
    two_core_split = cap <= 64 * 1024 * 1024          # v7x-like (64 MiB VMEM)
    work_budget = (vmem_limit * 2) // 3               # headroom for compiler scratch

    Bb, Tt = _select_tiles(B, T, H, itemsize, work_budget, two_core_split)
    n_b = pl.cdiv(B, Bb)                              # partial last block is clipped
    n_t = pl.cdiv(T, Tt)                              # partial last block is masked

    kernel = functools.partial(temporal_attention_kernel, t_total=T, t_block=Tt)

    return pl.pallas_call(
        kernel,
        out_shape=jax.ShapeDtypeStruct((B, H), x.dtype),
        grid_spec=pltpu.PrefetchScalarGridSpec(
            num_scalar_prefetch=0,
            grid=(n_b, n_t),
            in_specs=[
                pl.BlockSpec((Bb, Tt, H), lambda i, t: (i, t, 0)),
                pl.BlockSpec((1, 1, H), lambda i, t: (0, 0, 0)),
            ],
            out_specs=pl.BlockSpec((Bb, H), lambda i, t: (i, 0)),
            scratch_shapes=[
                pltpu.VMEM((Bb, 1), jnp.float32),     # running max
                pltpu.VMEM((Bb, 1), jnp.float32),     # running denominator
                pltpu.VMEM((Bb, H), jnp.float32),     # running context
            ],
        ),
        compiler_params=pltpu.CompilerParams(
            dimension_semantics=("parallel", "arbitrary"),  # batch shardable, T reduced
            vmem_limit_bytes=vmem_limit,
        ),
    )(x, w)


def temporal_attention_ref(x, weight, bias):
    """Pure-JAX reference matching the PyTorch module (bias included)."""
    scores = jnp.einsum("bth,oh->bto", x, weight) + bias      # (B, T, 1)
    attn = jax.nn.softmax(scores, axis=1)                     # softmax over time
    return jnp.sum(x * attn, axis=1)                          # (B, H)


if __name__ == "__main__":
    B, T, H = 2, 8, 32  # batch, seq (time), hidden

    key = jax.random.PRNGKey(0)
    kx, kw, kb = jax.random.split(key, 3)

    x = jax.random.normal(kx, (B, T, H), dtype=jnp.float32)

    # Deterministic init mimicking nn.Linear(hidden_dim, 1):
    bound = 1.0 / (H ** 0.5)
    weight = jax.random.uniform(kw, (1, H), jnp.float32, -bound, bound)
    bias = jax.random.uniform(kb, (1,), jnp.float32, -bound, bound)

    # f32 path (matches the module's dtype) — exact divide -> tight tolerance.
    out = jax.block_until_ready(temporal_attention(x, weight, bias))
    ref = temporal_attention_ref(x, weight, bias)
    assert out.shape == (B, H)
    assert jnp.allclose(out, ref, atol=1e-5, rtol=1e-5), (
        f"max abs diff {jnp.max(jnp.abs(out - ref))}"
    )

    # bf16 input path (halves HBM read traffic; f32 accumulation inside).
    xb = x.astype(jnp.bfloat16)
    outb = jax.block_until_ready(temporal_attention(xb, weight, bias))
    refb = temporal_attention_ref(xb.astype(jnp.float32), weight, bias)
    assert outb.shape == (B, H)
    assert jnp.allclose(outb.astype(jnp.float32), refb, atol=3e-2, rtol=3e-2), (
        f"max abs diff {jnp.max(jnp.abs(outb.astype(jnp.float32) - refb))}"
    )

    print("KERNEL_OK")
</pallas_src>

<mosaic_0001>
module attributes {stable_mosaic.version = 11 : i64} {
  func.func @temporal_attention_kernel(%arg0: i32, %arg1: i32, %arg2: memref<2x8x32xf32, #tpu.memory_space<vmem>>, %arg3: memref<1x1x32xf32, #tpu.memory_space<vmem>>, %arg4: memref<2x32xf32, #tpu.memory_space<vmem>>, %arg5: memref<2x1xf32, #tpu.memory_space<vmem>>, %arg6: memref<2x1xf32, #tpu.memory_space<vmem>>, %arg7: memref<2x32xf32, #tpu.memory_space<vmem>>) attributes {dimension_semantics = [#tpu.dimension_semantics<parallel>, #tpu.dimension_semantics<arbitrary>], iteration_bounds = array<i64: 1, 1>, scalar_prefetch = 0 : i64, scratch_operands = 3 : i64, tpu.core_type = #tpu.core_type<tc>, window_params = [{transform_indices = @transform_0, window_bounds = array<i64: 2, 8, 32>}, {pipeline_mode = #tpu.pipeline_mode<synchronous>, transform_indices = @transform_1, window_bounds = array<i64: 1, 1, 32>}, {transform_indices = @transform_2, window_bounds = array<i64: 2, 32>}]} {
    %c0_i32 = arith.constant 0 : i32
    %0 = arith.cmpi eq, %arg1, %c0_i32 : i32
    %1 = arith.extui %0 : i1 to i32
    %c0_i32_0 = arith.constant 0 : i32
    %2 = arith.cmpi ne, %1, %c0_i32_0 : i32
    scf.if %2 {
      %cst_23 = arith.constant 0xFF800000 : f32
      %36 = vector.broadcast %cst_23 : f32 to vector<2x1xf32>
      %c0_24 = arith.constant 0 : index
      %c0_25 = arith.constant 0 : index
      %37 = vector.load %arg5[%c0_24, %c0_25] : memref<2x1xf32, #tpu.memory_space<vmem>>, vector<2x1xf32>
      tpu.vector_store %arg5[%c0_24, %c0_25], %36 {strides = array<i32>} : memref<2x1xf32, #tpu.memory_space<vmem>>, vector<2x1xf32>,
      %cst_26 = arith.constant 0.000000e+00 : f32
      %38 = vector.broadcast %cst_26 : f32 to vector<2x1xf32>
      %c0_27 = arith.constant 0 : index
      %c0_28 = arith.constant 0 : index
      %39 = vector.load %arg6[%c0_27, %c0_28] : memref<2x1xf32, #tpu.memory_space<vmem>>, vector<2x1xf32>
      tpu.vector_store %arg6[%c0_27, %c0_28], %38 {strides = array<i32>} : memref<2x1xf32, #tpu.memory_space<vmem>>, vector<2x1xf32>,
      %cst_29 = arith.constant 0.000000e+00 : f32
      %40 = vector.broadcast %cst_29 : f32 to vector<2x32xf32>
      %c0_30 = arith.constant 0 : index
      %c0_31 = arith.constant 0 : index
      %41 = vector.load %arg7[%c0_30, %c0_31] : memref<2x32xf32, #tpu.memory_space<vmem>>, vector<2x32xf32>
      tpu.vector_store %arg7[%c0_30, %c0_31], %40 {strides = array<i32>} : memref<2x32xf32, #tpu.memory_space<vmem>>, vector<2x32xf32>,
    } else {
    }
    %c0 = arith.constant 0 : index
    %c0_1 = arith.constant 0 : index
    %c0_2 = arith.constant 0 : index
    %3 = vector.load %arg2[%c0, %c0_1, %c0_2] : memref<2x8x32xf32, #tpu.memory_space<vmem>>, vector<2x8x32xf32>
    %c0_3 = arith.constant 0 : index
    %c0_4 = arith.constant 0 : index
    %c0_5 = arith.constant 0 : index
    %4 = vector.load %arg3[%c0_3, %c0_4, %c0_5] : memref<1x1x32xf32, #tpu.memory_space<vmem>>, vector<1x1x32xf32>
    %5 = vector.broadcast %4 : vector<1x1x32xf32> to vector<2x8x32xf32>
    %6 = arith.mulf %3, %5 : vector<2x8x32xf32>
    %cst = arith.constant dense<0.000000e+00> : vector<2x8xf32>
    %7 = vector.multi_reduction <add>, %6, %cst [2] : vector<2x8x32xf32> to vector<2x8xf32>
    %c0_6 = arith.constant 0 : index
    %c0_7 = arith.constant 0 : index
    %8 = vector.load %arg5[%c0_6, %c0_7] : memref<2x1xf32, #tpu.memory_space<vmem>>, vector<2x1xf32>
    %cst_8 = arith.constant dense<0xFF800000> : vector<2xf32>
    %9 = vector.multi_reduction <maximumf>, %7, %cst_8 [1] : vector<2x8xf32> to vector<2xf32>
    %10 = vector.shape_cast %9 : vector<2xf32> to vector<2x1xf32>
    %11 = arith.maximumf %8, %10 : vector<2x1xf32>
    %12 = arith.subf %8, %11 : vector<2x1xf32>
    %13 = math.exp %12 : vector<2x1xf32>
    %14 = vector.broadcast %11 : vector<2x1xf32> to vector<2x8xf32>
    %15 = arith.subf %7, %14 : vector<2x8xf32>
    %16 = math.exp %15 : vector<2x8xf32>
    %c0_9 = arith.constant 0 : index
    %c0_10 = arith.constant 0 : index
    %17 = vector.load %arg6[%c0_9, %c0_10] : memref<2x1xf32, #tpu.memory_space<vmem>>, vector<2x1xf32>
    %18 = arith.mulf %13, %17 : vector<2x1xf32>
    %cst_11 = arith.constant dense<0.000000e+00> : vector<2xf32>
    %19 = vector.multi_reduction <add>, %16, %cst_11 [1] : vector<2x8xf32> to vector<2xf32>
    %20 = vector.shape_cast %19 : vector<2xf32> to vector<2x1xf32>
    %21 = arith.addf %18, %20 : vector<2x1xf32>
    %c0_12 = arith.constant 0 : index
    %c0_13 = arith.constant 0 : index
    %22 = vector.load %arg6[%c0_12, %c0_13] : memref<2x1xf32, #tpu.memory_space<vmem>>, vector<2x1xf32>
    tpu.vector_store %arg6[%c0_12, %c0_13], %21 {strides = array<i32>} : memref<2x1xf32, #tpu.memory_space<vmem>>, vector<2x1xf32>,
    %c0_14 = arith.constant 0 : index
    %c0_15 = arith.constant 0 : index
    %23 = vector.load %arg7[%c0_14, %c0_15] : memref<2x32xf32, #tpu.memory_space<vmem>>, vector<2x32xf32>
    %24 = vector.broadcast %13 : vector<2x1xf32> to vector<2x32xf32>
    %25 = arith.mulf %24, %23 : vector<2x32xf32>
    %26 = vector.shape_cast %16 : vector<2x8xf32> to vector<2x8x1xf32>
    %27 = vector.broadcast %26 : vector<2x8x1xf32> to vector<2x8x32xf32>
    %28 = arith.mulf %3, %27 : vector<2x8x32xf32>
    %cst_16 = arith.constant dense<0.000000e+00> : vector<2x32xf32>
    %29 = vector.multi_reduction <add>, %28, %cst_16 [1] : vector<2x8x32xf32> to vector<2x32xf32>
    %30 = arith.addf %25, %29 : vector<2x32xf32>
    %c0_17 = arith.constant 0 : index
    %c0_18 = arith.constant 0 : index
    %31 = vector.load %arg7[%c0_17, %c0_18] : memref<2x32xf32, #tpu.memory_space<vmem>>, vector<2x32xf32>
    tpu.vector_store %arg7[%c0_17, %c0_18], %30 {strides = array<i32>} : memref<2x32xf32, #tpu.memory_space<vmem>>, vector<2x32xf32>,
    %c0_19 = arith.constant 0 : index
    %c0_20 = arith.constant 0 : index
    %32 = vector.load %arg5[%c0_19, %c0_20] : memref<2x1xf32, #tpu.memory_space<vmem>>, vector<2x1xf32>
    tpu.vector_store %arg5[%c0_19, %c0_20], %11 {strides = array<i32>} : memref<2x1xf32, #tpu.memory_space<vmem>>, vector<2x1xf32>,
    %c0_i32_21 = arith.constant 0 : i32
    %33 = arith.cmpi eq, %arg1, %c0_i32_21 : i32
    %34 = arith.extui %33 : i1 to i32
    %c0_i32_22 = arith.constant 0 : i32
    %35 = arith.cmpi ne, %34, %c0_i32_22 : i32
    scf.if %35 {
      %c0_23 = arith.constant 0 : index
      %c0_24 = arith.constant 0 : index
      %36 = vector.load %arg7[%c0_23, %c0_24] : memref<2x32xf32, #tpu.memory_space<vmem>>, vector<2x32xf32>
      %c0_25 = arith.constant 0 : index
      %c0_26 = arith.constant 0 : index
      %37 = vector.load %arg6[%c0_25, %c0_26] : memref<2x1xf32, #tpu.memory_space<vmem>>, vector<2x1xf32>
      %38 = vector.broadcast %37 : vector<2x1xf32> to vector<2x32xf32>
      %39 = arith.divf %36, %38 : vector<2x32xf32>
      %c0_27 = arith.constant 0 : index
      %c0_28 = arith.constant 0 : index
      %40 = vector.load %arg4[%c0_27, %c0_28] : memref<2x32xf32, #tpu.memory_space<vmem>>, vector<2x32xf32>
      tpu.vector_store %arg4[%c0_27, %c0_28], %39 {strides = array<i32>} : memref<2x32xf32, #tpu.memory_space<vmem>>, vector<2x32xf32>,
    } else {
    }
    return
  }
  func.func @transform_0(%arg0: i32, %arg1: i32) -> (i32, i32, i32) {
    %c0_i32 = arith.constant 0 : i32
    %c0_i32_0 = arith.constant 0 : i32
    return %arg0, %arg1, %c0_i32 : i32, i32, i32
  }
  func.func @transform_1(%arg0: i32, %arg1: i32) -> (i32, i32, i32) {
    %c0_i32 = arith.constant 0 : i32
    %c0_i32_0 = arith.constant 0 : i32
    %c0_i32_1 = arith.constant 0 : i32
    %c0_i32_2 = arith.constant 0 : i32
    return %c0_i32, %c0_i32_0, %c0_i32_1 : i32, i32, i32
  }
  func.func @transform_2(%arg0: i32, %arg1: i32) -> (i32, i32) {
    %c0_i32 = arith.constant 0 : i32
    %c0_i32_0 = arith.constant 0 : i32
    return %arg0, %c0_i32 : i32, i32
  }
}

</mosaic_0001>

<llo_original>
// kernel: tpu_custom_call.1
$region0: #{tpu_custom_call.1}
  #allocation0 [shape = 'u32[]', space=smem, size = 0x4, offset = 0x4, fixed_abs, tag = 'smem constant byte address 0x4 - core index']
  #allocation1 [shape = 'u32[144,128]{1,0:T(1,128)}', space=vmem, size = 0x12000, scoped, tag = 'internal scratch']
  #allocation2 [shape = 'f32[2,1]{1,0:T(2,128)}', space=vmem, size = 0x400, scoped, tag = 'scratch operand']
  #allocation3 [shape = 'f32[2,1]{1,0:T(2,128)}', space=vmem, size = 0x400, scoped, tag = 'scratch operand']
  #allocation4 [shape = 'f32[2,32]{1,0:T(2,128)}', space=vmem, size = 0x400, scoped, tag = 'scratch operand']
  %s0 = inlined_call_operand.hbm [shape: f32[2,8,32], index: 0, kind: input, shape index: {}]
  %s1 = inlined_call_operand.vmem [shape: f32[1,1,32], index: 1, kind: input, shape index: {}]
  %s2 = inlined_call_operand.hbm [shape: f32[2,32], index: 2, kind: output, shape index: {}]
  %s3 = sld [smem:[#allocation0]]
  $region30: #{tpu_custom_call.1} parent=0
    _
  %s5 = ssub.s32 1, %s3
  %s6 = scalar_select 0, %s5, %s3
  $region1: #{tpu_custom_call.1} parent=0
    #allocation5 [shape = 'u8[8192]{0}', space=vmem, size = 0x2000, scoped, tag = 'input window, operand 0, single buffered']
    #allocation6 [shape = 's32[1]{0}', space=sflag, size = 0x4, scoped, tag = 'scoped memory for tpu_custom_call.1']
    #allocation7 [shape = 's32[1]{0}', space=sflag, size = 0x4, scoped, tag = 'scoped memory for tpu_custom_call.1']
    #allocation8 [shape = 'u8[1024]{0}', space=vmem, size = 0x400, scoped, tag = 'output window, operand 0, single buffered']
    %7 = vsyncpa [#allocation6], 0
    %8 = vsyncpa [#allocation7], 0
    // Predicated region
    $region2: #{tpu_custom_call.1} parent=1 // pred_check
      _
    $region3: #{tpu_custom_call.1} parent=1 // pred_check_branch
      %10 = sbr.rel (0) target = $region5
    $region4: #{tpu_custom_call.1} parent=1 // pred_region
      %s12 = ssub.s32 256, 256
      %13 = vsyncadd [#allocation6], %s12
      %s14 = sshll.u32 [#allocation5], 4
      %s15 = int_to_ptr.vmem [resolvable:$true] %s14
      %20 = dma.hbm_to_vmem [thread:$0]  %s0, 256, %s15, [#allocation6], 128, 128, 8
    $region5: #{tpu_custom_call.1} parent=1 // pred_fallthru
      _
    // Predicated region
    $region6: #{tpu_custom_call.1} parent=1 // pred_check
      _
    $region7: #{tpu_custom_call.1} parent=1 // pred_check_branch
      %22 = sbr.rel (0) target = $region9
    $region8: #{tpu_custom_call.1} parent=1 // pred_region
      _
    $region9: #{tpu_custom_call.1} parent=1 // pred_fallthru
      _
    // Predicated region
    $region10: #{tpu_custom_call.1} parent=1 // pred_check
      _
    $region11: #{tpu_custom_call.1} parent=1 // pred_check_branch
      %24 = sbr.rel (0) target = $region13
    $region12: #{tpu_custom_call.1} parent=1 // pred_region
      %25 = dma.done [#allocation6], 256
    $region13: #{tpu_custom_call.1} parent=1 // pred_fallthru
      _
    %p26 = scmp.eq.s32.totalorder 0, 0
    // Predicated region
    $region14: #{tpu_custom_call.1} parent=1 // pred_check
      %p27 = pneg %p26
    $region15: #{tpu_custom_call.1} parent=1 // pred_check_branch
      %29 = sbr.rel (%p27) target = $region17
    $region16: #{tpu_custom_call.1} parent=1 // pred_region
      %vm30 = vcmask 1024
      %31 = vst.msk [vmem:[#allocation2] sm:$0x3] %vm30, -inf
      %32 = vst.msk [vmem:[#allocation3] sm:$0x3] %vm30, 0.0
      %vm33 = vcmask 254976
      %34 = vst.msk [vmem:[#allocation4] sm:$0x3] %vm33, 0.0
    $region17: #{tpu_custom_call.1} parent=1 // pred_fallthru
      _
    %v35 = vld [vmem:[#allocation5] sm:$0xff]
    %v36 = vld [vmem:[#allocation5 + $0x8] sm:$0xff]
    %v37 = vld [vmem:[%s1] sm:$0x1]
    %v39 = vlaneseq
    %v40 = vshrl.u32 %v39, 7
    %v41 = vsub.s32 0, %v40
    %v42 = vrot.slane %v37, %v41
    %v44 = vmul.f32 %v35, %v42
    %v45 = vmul.f32 %v36, %v42
    %vm46 = vcmask 261120
    %v47 = vsel %vm46, %v44, 0.0
    %48 = vadd.xlane.f32.xlu0 %v47
    %v49 = vpop.xlane.xlu0 %48
    %v50 = vsel %vm46, %v45, 0.0
    %51 = vadd.xlane.f32.xlu0 %v50
    %v52 = vpop.xlane.xlu0 %51
    %v53 = vld [vmem:[#allocation2] sm:$0x3]
    %v56 = vlaneseq
    %v57 = vand.u32 %v56, 127
    %v58 = vlaneseq
    %v59 = vshrl.u32 %v58, 7
    %v60 = vsub.s32 %v57, %v59
    %v61 = vrot.slane %v49, %v60
    %v62 = vlaneseq
    %v63 = vshrl.u32 %v62, 7
    %v64 = vsub.s32 %v57, %v63
    %v65 = vrot.slane %v52, %v64
    %vm66 = vcmask 1041409
    %v67 = vsel %vm66, %v65, %v61
    %vm69 = vcmask 58368
    %v70 = vsel %vm69, %v67, -inf
    %71 = vmax.xlane.f32.xlu0 %v70
    %v72 = vpop.xlane.xlu0 %71
    %v73 = vmax.f32 %v53, %v72
    %v74 = vsub.f32 %v53, %v73
    %v75 = vmul.f32 %v74, 1.442695
    %v76 = vpow.pop %v75
    %78 = vset.pattern.permute.xlu0 0
    %79 = vperm.xlu0 %78, %v73
    %v80 = vpop.permute.xlu0 %79
    %v81 = vlaneseq
    %v82 = vshrl.u32 %v81, 7
    %v83 = vsub.s32 0, %v82
    %v84 = vrot.slane %v80, %v83
    %v85 = vlaneseq
    %v86 = vshrl.u32 %v85, 7
    %v87 = vsub.s32 1, %v86
    %v88 = vrot.slane %v80, %v87
    %v91 = vsub.f32 %v49, %v84
    %v92 = vsub.f32 %v52, %v88
    %v93 = vmul.f32 %v91, 1.442695
    %v94 = vpow.pop %v93
    %v95 = vmul.f32 %v92, 1.442695
    %v96 = vpow.pop %v95
    %v97 = vld [vmem:[#allocation3] sm:$0x3]
    %v98 = vmul.f32 %v76, %v97
    %101 = vset.pattern.permute.xlu0 0
    %102 = vperm.xlu0 %101, %v94
    %v103 = vpop.permute.xlu0 %102
    %104 = vset.pattern.permute.xlu0 0
    %105 = vperm.xlu0 %104, %v96
    %v106 = vpop.permute.xlu0 %105
    %v107 = vlaneseq
    %v108 = vshrl.u32 %v107, 7
    %v109 = vsub.s32 %v57, %v108
    %v110 = vrot.slane %v103, %v109
    %v111 = vlaneseq
    %v112 = vshrl.u32 %v111, 7
    %v113 = vsub.s32 %v57, %v112
    %v114 = vrot.slane %v106, %v113
    %v115 = vsel %vm66, %v114, %v110
    %v117 = vsel %vm69, %v115, 0.0
    %118 = vadd.xlane.f32.xlu0 %v117
    %v119 = vpop.xlane.xlu0 %118
    %v120 = vadd.f32 %v98, %v119
    %vm121 = vcmask 1024
    %122 = vst.msk [vmem:[#allocation3] sm:$0x3] %vm121, %v120
    %v123 = vld [vmem:[#allocation4] sm:$0x3]
    %125 = vset.pattern.permute.xlu0 0
    %126 = vperm.xlu0 %125, %v76
    %v127 = vpop.permute.xlu0 %126
    %v129 = vmul.f32 %v127, %v123
    %v132 = vmul.f32 %v35, %v103
    %v133 = vmul.f32 %v36, %v106
    %v134 = vsel %vm46, %v132, 0.0
    %v135 = vrot.slane %v134, 4
    %v136 = vadd.f32 %v134, %v135
    %v137 = vrot.slane %v136, 2
    %v138 = vadd.f32 %v136, %v137
    %v139 = vrot.slane %v138, 1
    %v140 = vadd.f32 %v138, %v139
    %v141 = vsel %vm46, %v133, 0.0
    %v142 = vrot.slane %v141, 4
    %v143 = vadd.f32 %v141, %v142
    %v144 = vrot.slane %v143, 2
    %v145 = vadd.f32 %v143, %v144
    %v146 = vrot.slane %v145, 1
    %v147 = vadd.f32 %v145, %v146
    %v150 = vsel %vm66, %v147, %v140
    %v152 = vadd.f32 %v129, %v150
    %vm153 = vcmask 254976
    %154 = vst.msk [vmem:[#allocation4] sm:$0x3] %vm153, %v152
    %155 = vst.msk [vmem:[#allocation2] sm:$0x3] %vm121, %v73
    // Predicated region
    $region18: #{tpu_custom_call.1} parent=1 // pred_check
      %p156 = pneg %p26
    $region19: #{tpu_custom_call.1} parent=1 // pred_check_branch
      %158 = sbr.rel (%p156) target = $region21
    $region20: #{tpu_custom_call.1} parent=1 // pred_region
      %v159 = vld [vmem:[#allocation4] sm:$0x3]
      %v160 = vld [vmem:[#allocation3] sm:$0x3]
      %162 = vset.pattern.permute.xlu0 0
      %163 = vperm.xlu0 %162, %v160
      %v164 = vpop.permute.xlu0 %163
      %v166 = vrcp.pop %v164
      %v167 = vmul.f32 %v159, %v166
      %168 = vst.msk [vmem:[#allocation8] sm:$0x3] %vm153, %v167
    $region21: #{tpu_custom_call.1} parent=1 // pred_fallthru
      _
    // Predicated region
    $region22: #{tpu_custom_call.1} parent=1 // pred_check
      _
    $region23: #{tpu_custom_call.1} parent=1 // pred_check_branch
      %170 = sbr.rel (0) target = $region25
    $region24: #{tpu_custom_call.1} parent=1 // pred_region
      %s172 = ssub.s32 32, 32
      %173 = vsyncadd [#allocation7], %s172
      %s175 = sshll.u32 [#allocation8], 4
      %s176 = int_to_ptr.vmem [resolvable:$true] %s175
      %178 = dma.vmem_to_hbm [thread:$0]  %s176, 32, %s2, [#allocation7]
    $region25: #{tpu_custom_call.1} parent=1 // pred_fallthru
      _
    // Predicated region
    $region26: #{tpu_custom_call.1} parent=1 // pred_check
      _
    $region27: #{tpu_custom_call.1} parent=1 // pred_check_branch
      %180 = sbr.rel (0) target = $region29
    $region28: #{tpu_custom_call.1} parent=1 // pred_region
      %181 = dma.done [#allocation7], 32
    $region29: #{tpu_custom_call.1} parent=1 // pred_fallthru
      _
    %182 = vsyncpa [#allocation6], 1
    %183 = vsyncpa [#allocation7], 1

</llo_original>
